<compile_context>
chip_gen: v5e
topology: v5e:2x2
jax: 0.10.0
libtpu: 0.0.40
codegen_flags: <defaults>
</compile_context>

<pallas_src>
import jax
import jax.numpy as jnp
from jax.experimental import pallas as pl
from jax.experimental.pallas import tpu as pltpu  # noqa: F401  (imported per convention)


def _softmax_kernel(x_ref, o_ref):
    # Whole (1, N_pad) tile resident in VMEM; numerically stable softmax on the lane axis.
    x = x_ref[...]
    m = jnp.max(x, axis=-1, keepdims=True)
    e = jnp.exp(x - m)                      # exp(-inf - m) == 0 for padded lanes
    s = jnp.sum(e, axis=-1, keepdims=True)
    o_ref[...] = e / s                      # exact divide: rows sum to 1 within ~1e-6


@jax.jit
def _softmax_lastdim(x: jax.Array) -> jax.Array:
    """Softmax over the last dim of a (1, N) f32 row using a single-block Pallas kernel."""
    n = x.shape[-1]
    n_pad = pl.cdiv(n, 128) * 128
    # -inf padding: padded lanes contribute exp(-inf) == 0 to the sum.
    xp = jnp.pad(x, ((0, 0), (0, n_pad - n)), constant_values=-jnp.inf)
    out = pl.pallas_call(
        _softmax_kernel,
        out_shape=jax.ShapeDtypeStruct(xp.shape, xp.dtype),
        in_specs=[pl.BlockSpec(xp.shape, lambda: (0, 0))],
        out_specs=pl.BlockSpec(xp.shape, lambda: (0, 0)),
    )(xp)
    return out[:, :n]


class NetWeights:
    """JAX/Pallas port of the PyTorch NetWeights module (forward semantics preserved)."""

    def __init__(self, n_modalities: int, net_idx: int,
                 init_mode: str = "max_own", con: bool = True):
        self.con = con
        if con:
            if init_mode == "max_own":
                scales = jnp.asarray(
                    [1.0 if i == net_idx else 0.0 for i in range(n_modalities)],
                    dtype=jnp.float32,
                ).reshape((1, -1))
            elif init_mode == "uniform":
                scales = (jnp.ones((n_modalities,), dtype=jnp.float32)
                          / n_modalities).reshape((1, -1))
            else:
                raise ValueError(f"unknown init_mode {init_mode!r}")
        else:
            # PyTorch: con=False always uses the non-trainable max_own buffer,
            # regardless of init_mode (mirrored exactly here).
            scales = jnp.asarray(
                [1.0 if i == net_idx else 0.0 for i in range(n_modalities)],
                dtype=jnp.float32,
            ).reshape((1, -1))
        self.net_scales = scales

    def __call__(self) -> jax.Array:
        if self.con:
            # Softmax output is non-negative by construction; the PyTorch-side
            # host assert is intentionally omitted (it forced a device sync).
            return _softmax_lastdim(self.net_scales)
        return self.net_scales


if __name__ == "__main__":
    # Deterministic setup: parameters are fully determined by
    # (n_modalities, net_idx, init_mode); PRNGKey(0) only provides a
    # reproducible perturbation so the softmax is non-trivial.
    n_modalities = 4
    net_idx = 1

    key = jax.random.PRNGKey(0)
    perturb = 0.1 * jax.random.normal(key, (1, n_modalities), dtype=jnp.float32)

    mod = NetWeights(n_modalities=n_modalities, net_idx=net_idx,
                     init_mode="max_own", con=True)
    # simulate a slightly "trained" parameter so the softmax is non-trivial
    mod.net_scales = mod.net_scales + perturb

    out = jax.block_until_ready(mod())

    # correctness check against plain-JAX reference softmax (eager-only, off hot path)
    ref = jax.nn.softmax(mod.net_scales, axis=-1)
    assert out.shape == (1, n_modalities), out.shape
    assert jnp.allclose(out, ref, atol=1e-6), (out, ref)
    assert jnp.allclose(jnp.sum(out, axis=-1), 1.0, atol=1e-6)
    assert bool(jnp.all(out >= 0))

    # con=False path: raw buffer passthrough, no kernel invoked
    mod_nc = NetWeights(n_modalities=n_modalities, net_idx=net_idx, con=False)
    out_nc = jax.block_until_ready(mod_nc())
    assert jnp.allclose(out_nc, mod_nc.net_scales)

    print("KERNEL_OK")
</pallas_src>

<mosaic_0001>
module attributes {stable_mosaic.version = 11 : i64} {
  func.func @_softmax_kernel(%arg0: memref<1x128xf32, #tpu.memory_space<vmem>>, %arg1: memref<1x128xf32, #tpu.memory_space<vmem>>) attributes {dimension_semantics = [], scalar_prefetch = 0 : i64, scratch_operands = 0 : i64, tpu.core_type = #tpu.core_type<tc>} {
    %c0 = arith.constant 0 : index
    %c0_0 = arith.constant 0 : index
    %0 = vector.load %arg0[%c0, %c0_0] : memref<1x128xf32, #tpu.memory_space<vmem>>, vector<1x128xf32>
    %cst = arith.constant dense<0xFF800000> : vector<1xf32>
    %1 = vector.multi_reduction <maximumf>, %0, %cst [1] : vector<1x128xf32> to vector<1xf32>
    %2 = vector.shape_cast %1 : vector<1xf32> to vector<1x1xf32>
    %3 = vector.broadcast %2 : vector<1x1xf32> to vector<1x128xf32>
    %4 = arith.subf %0, %3 : vector<1x128xf32>
    %5 = math.exp %4 : vector<1x128xf32>
    %cst_1 = arith.constant dense<0.000000e+00> : vector<1xf32>
    %6 = vector.multi_reduction <add>, %5, %cst_1 [1] : vector<1x128xf32> to vector<1xf32>
    %7 = vector.shape_cast %6 : vector<1xf32> to vector<1x1xf32>
    %8 = vector.broadcast %7 : vector<1x1xf32> to vector<1x128xf32>
    %9 = arith.divf %5, %8 : vector<1x128xf32>
    %c0_2 = arith.constant 0 : index
    %c0_3 = arith.constant 0 : index
    %10 = vector.load %arg1[%c0_2, %c0_3] : memref<1x128xf32, #tpu.memory_space<vmem>>, vector<1x128xf32>
    tpu.vector_store %arg1[%c0_2, %c0_3], %9 {strides = array<i32>} : memref<1x128xf32, #tpu.memory_space<vmem>>, vector<1x128xf32>,
    return
  }
}

</mosaic_0001>

<llo_original>
// kernel: _softmax_lastdim.1
$region0: #{_softmax_lastdim.1}
  #allocation0 [shape = 'u32[]', space=smem, size = 0x4, offset = 0x4, fixed_abs, tag = 'smem constant byte address 0x4 - core index']
  #allocation1 [shape = 'u32[72,128]{1,0:T(1,128)}', space=vmem, size = 0x9000, scoped, tag = 'internal scratch']
  %s0 = inlined_call_operand.vmem [shape: f32[1,128], index: 0, kind: input, shape index: {}]
  %s1 = inlined_call_operand.hbm [shape: f32[1,128], index: 1, kind: output, shape index: {}]
  %s2 = sld [smem:[#allocation0]]
  $region14: #{_softmax_lastdim.1} parent=0
    _
  %s4 = ssub.s32 1, %s2
  %s5 = scalar_select 0, %s4, %s2
  $region1: #{_softmax_lastdim.1} parent=0
    #allocation2 [shape = 'u8[512]{0}', space=vmem, size = 0x400, scoped, tag = 'output window, operand 0, single buffered']
    #allocation3 [shape = 's32[1]{0}', space=sflag, size = 0x4, scoped, tag = 'scoped memory for _softmax_lastdim.1']
    %6 = vsyncpa [#allocation3], 0
    // Predicated region
    $region2: #{_softmax_lastdim.1} parent=1 // pred_check
      _
    $region3: #{_softmax_lastdim.1} parent=1 // pred_check_branch
      %8 = sbr.rel (0) target = $region5
    $region4: #{_softmax_lastdim.1} parent=1 // pred_region
      _
    $region5: #{_softmax_lastdim.1} parent=1 // pred_fallthru
      _
    %v9 = vld [vmem:[%s0] sm:$0x1]
    %vm10 = vcmask 1040384
    %v11 = vsel %vm10, %v9, -inf
    %12 = vmax.xlane.f32.xlu0 %v11
    %v13 = vpop.xlane.xlu0 %12
    %v14 = vsub.f32 %v9, %v13
    %v15 = vmul.f32 %v14, 1.442695
    %v16 = vpow.pop %v15
    %v17 = vsel %vm10, %v16, 0.0
    %18 = vadd.xlane.f32.xlu0 %v17
    %v19 = vpop.xlane.xlu0 %18
    %v20 = vrcp.pop %v19
    %v21 = vmul.f32 %v19, %v20
    %v22 = vsub.f32 1.0, %v21
    %v23 = vmul.f32 %v20, %v22
    %v24 = vadd.f32 %v20, %v23
    %vm25 = vweird.f32 %v19
    %vm26 = vweird.f32 %v20
    %vm27 = vmor %vm25, %vm26
    %v28 = vsel %vm27, %v20, %v24
    %v29 = vand.u32 2147483647, %v19
    %vm30 = vcmp.eq.f32.partialorder %v29, 8.507059e+37
    %v31 = vand.u32 %v19, 2147483648
    %v32 = vor.u32 1.1754944e-38, %v31
    %v33 = vsel %vm30, %v32, %v28
    %v34 = vmul.f32 %v16, %v33
    %35 = vst [vmem:[#allocation2] sm:$0x1] %v34
    // Predicated region
    $region6: #{_softmax_lastdim.1} parent=1 // pred_check
      _
    $region7: #{_softmax_lastdim.1} parent=1 // pred_check_branch
      %37 = sbr.rel (0) target = $region9
    $region8: #{_softmax_lastdim.1} parent=1 // pred_region
      %39 = vsyncadd [#allocation3], 0
      %s41 = sshll.u32 [#allocation2], 4
      %s42 = int_to_ptr.vmem [resolvable:$true] %s41
      %s43 = sshll.u32 %s1, 4
      %s44 = int_to_ptr.hbm [resolvable:$true] %s43
      %46 = dma.vmem_to_hbm [thread:$0]  %s42, 16, %s44, [#allocation3]
    $region9: #{_softmax_lastdim.1} parent=1 // pred_fallthru
      _
    // Predicated region
    $region10: #{_softmax_lastdim.1} parent=1 // pred_check
      _
    $region11: #{_softmax_lastdim.1} parent=1 // pred_check_branch
      %48 = sbr.rel (0) target = $region13
    $region12: #{_softmax_lastdim.1} parent=1 // pred_region
      %50 = dma.done [#allocation3], 16
    $region13: #{_softmax_lastdim.1} parent=1 // pred_fallthru
      _
    %51 = vsyncpa [#allocation3], 1

</llo_original>
